<compile_context>
chip_gen: v5e
topology: v5e:2x2
jax: 0.10.0
libtpu: 0.0.40
codegen_flags: <defaults>
</compile_context>

<pallas_src>
import functools

import jax
import jax.numpy as jnp
import numpy as np
from jax import lax
from jax.experimental import pallas as pl
from jax.experimental.pallas import tpu as pltpu


def _round_up(x, m):
    return ((x + m - 1) // m) * m


def _dscrmnt_kernel(pert_ref,        # VMEM (GT, K)  int32 perturbation tile
                    feats_ref,       # VMEM (N, D)   f32 node features (resident)
                    w_ref,           # VMEM (D, OUT_W) fused total weight
                    b_ref,           # VMEM (1, OUT_W) fused total bias
                    out_ref,         # VMEM (GT, OUT_W) packed logits tile
                    *, K, N, readout):
    GT = out_ref.shape[0]
    feats = feats_ref[...]                                      # (N, D), loaded once
    D = feats.shape[1]

    # hoisted constants (JAX does not CSE broadcast_in_dim)
    lane_iota = lax.broadcasted_iota(jnp.int32, (GT, N), 1)     # column ids 0..N-1
    acc = jnp.full((GT, D), -jnp.inf, dtype=jnp.float32)

    # ---- graph_read_out: one-hot MXU gather + running max over K selections ----
    for k in range(K):                                          # K small & static -> unrolled
        idx = pert_ref[:, k:k + 1]                              # (GT, 1) int32
        if readout == 'max':
            # mimic PyTorch negative-index wraparound
            idx = jnp.where(idx < 0, idx + N, idx)
        # 'max_zero': idx == -1 matches no column -> all-zero gathered row, which is
        # exactly the explicit zero row the reference concatenates before the max.
        # NOTE: an index >= N gathers a zero row instead of erroring like torch.
        onehot = (lane_iota == idx).astype(jnp.float32)                     # (GT, N)
        row = jnp.dot(onehot, feats, preferred_element_type=jnp.float32)    # (GT, D)
        acc = jnp.maximum(acc, row)

    # ---- fc_graph + fc_node[t] + OPD_out_node / OPD_out_graph, all folded into
    # one lane-dense (GT, D) @ (D, OUT_W) matmul ----
    out_ref[...] = (jnp.dot(acc, w_ref[...], preferred_element_type=jnp.float32)
                    + b_ref[...])


def _forward_impl(feats, perturbation, params, *, readout='max', ablation=None):
    feats = jnp.asarray(feats, jnp.float32)
    N, D = feats.shape
    pert = jnp.asarray(perturbation, jnp.int32)
    G, K = pert.shape
    T = params['W_node'].shape[0]

    GT = min(128, _round_up(G, 8))            # full-height MXU tile for large G
    G_pad = _round_up(G, GT)
    num_tiles = G_pad // GT
    OUT_W = _round_up(T + 1, 128)             # lane-dense packed-output width

    if G_pad > G:
        # pad with index 0 (valid row); padded graph rows are discarded afterwards
        pert = jnp.concatenate([pert, jnp.zeros((G_pad - G, K), jnp.int32)], axis=0)

    # ---- host-side weight folding (runs under jit -> fused, cached per shape) ----
    wg = jnp.asarray(params['W_graph'], jnp.float32)             # (D, D) torch (out, in)
    bg = jnp.asarray(params['b_graph'], jnp.float32).reshape(1, D)
    w_node = jnp.asarray(params['W_node'], jnp.float32)          # (T, D, D) (out, in)
    b_node = jnp.asarray(params['b_node'], jnp.float32)          # (T, D)
    won = jnp.asarray(params['W_out_node'], jnp.float32).reshape(D)
    bon = jnp.asarray(params['b_out_node'], jnp.float32).reshape(())
    wog = jnp.asarray(params['W_out_graph'], jnp.float32).reshape(D)
    bog = jnp.asarray(params['b_out_graph'], jnp.float32).reshape(())

    # fc_node[t] + OPD_out_node collapse to a (D, T) weight; OPD_out_graph is column T
    w_node_comb = jnp.einsum('tod,o->dt', w_node, won)           # (D, T)
    b_node_comb = b_node @ won + bon                             # (T,)
    w_head = (jnp.zeros((D, OUT_W), jnp.float32)
              .at[:, :T].set(w_node_comb).at[:, T].set(wog))
    b_head = (jnp.zeros((1, OUT_W), jnp.float32)
              .at[0, :T].set(b_node_comb).at[0, T].set(bog))
    # fold fc_graph (x @ Wg^T + bg) into the head: everything after readout is linear
    w_total = wg.T @ w_head                                      # (D, OUT_W)
    b_total = bg @ w_head + b_head                               # (1, OUT_W)

    kernel = functools.partial(_dscrmnt_kernel, K=K, N=N, readout=readout)

    # explicit VMEM budget: all blocks (worst-case double-buffered) + headroom
    est_bytes = 4 * (2 * N * D            # feats
                     + 2 * GT * 128       # perturbation tile (lane-padded)
                     + 2 * D * OUT_W      # fused weight
                     + 2 * 8 * OUT_W      # fused bias (sublane-padded)
                     + 2 * GT * OUT_W)    # output tile
    vmem_limit = int(min(max(2 * est_bytes, 32 << 20), 100 << 20))

    grid_spec = pltpu.PrefetchScalarGridSpec(
        num_scalar_prefetch=0,
        grid=(num_tiles,),
        in_specs=[
            pl.BlockSpec((GT, K), lambda i: (i, 0)),         # perturbation tile
            pl.BlockSpec((N, D), lambda i: (0, 0)),          # feats (VMEM resident)
            pl.BlockSpec((D, OUT_W), lambda i: (0, 0)),      # fused total weight
            pl.BlockSpec((1, OUT_W), lambda i: (0, 0)),      # fused total bias
        ],
        out_specs=pl.BlockSpec((GT, OUT_W), lambda i: (i, 0)),
    )

    packed = pl.pallas_call(
        kernel,
        out_shape=jax.ShapeDtypeStruct((G_pad, OUT_W), jnp.float32),
        grid_spec=grid_spec,
        compiler_params=pltpu.CompilerParams(
            dimension_semantics=("parallel",),
            vmem_limit_bytes=vmem_limit),
    )(pert, feats, w_total, b_total)

    # torch ordering: read_out_node.transpose(0,1).reshape(-1, D) -> row g*T + t
    logits_node = packed[:G, :T].reshape(G * T, 1)
    logits_graph = packed[:G, T:T + 1]

    if ablation == 'node':
        logits_node = jnp.zeros_like(logits_node)
    elif ablation == 'graph':
        logits_graph = jnp.zeros_like(logits_graph)
    return logits_node, logits_graph


# jit the wrapper so the host-side weight folding / padding fuses into one dispatch
dscrmnt_v2_forward = jax.jit(_forward_impl, static_argnames=('readout', 'ablation'))


def _ref_forward(feats, perturbation, params, readout='max'):
    # numpy reference mirroring the PyTorch forward (ablation=None)
    feats = np.asarray(feats)
    pert = np.asarray(perturbation)
    P = {k: np.asarray(v) for k, v in params.items()}
    G = pert.shape[0]
    T, D = P['b_node'].shape
    ros = []
    for g in range(G):
        idx = pert[g]
        if readout == 'max_zero':
            emb = feats[idx[idx >= 0]]
            n_zero = int((idx < 0).sum())
            if n_zero:
                emb = np.concatenate([emb, np.zeros((n_zero, D), np.float32)], axis=0)
        else:
            emb = feats[idx]
        ros.append(emb.max(axis=0))
    ro = np.stack(ros)
    rg = ro @ P['W_graph'].T + P['b_graph']
    rn = np.stack([rg @ P['W_node'][t].T + P['b_node'][t] for t in range(T)])
    rn = np.transpose(rn, (1, 0, 2)).reshape(-1, D)
    ln = rn @ P['W_out_node'].T + P['b_out_node']
    lg = rg @ P['W_out_graph'].T + P['b_out_graph']
    return ln, lg


if __name__ == "__main__":
    # small shapes: N nodes, D = out_dim, G graphs, K nodes/graph, T = ntype
    N, D, G, K, T = 16, 32, 4, 5, 3

    key = jax.random.PRNGKey(0)
    ks = jax.random.split(key, 10)

    feats = jax.random.normal(ks[0], (N, D), dtype=jnp.float32)
    perturbation = jax.random.randint(ks[1], (G, K), 0, N, dtype=jnp.int32)

    params = {
        'W_graph':     0.1 * jax.random.normal(ks[2], (D, D), dtype=jnp.float32),
        'b_graph':     0.1 * jax.random.normal(ks[3], (D,),   dtype=jnp.float32),
        'W_node':      0.1 * jax.random.normal(ks[4], (T, D, D), dtype=jnp.float32),
        'b_node':      0.1 * jax.random.normal(ks[5], (T, D),    dtype=jnp.float32),
        'W_out_node':  0.1 * jax.random.normal(ks[6], (1, D), dtype=jnp.float32),
        'b_out_node':  0.1 * jax.random.normal(ks[7], (1,),   dtype=jnp.float32),
        'W_out_graph': 0.1 * jax.random.normal(ks[8], (1, D), dtype=jnp.float32),
        'b_out_graph': 0.1 * jax.random.normal(ks[9], (1,),   dtype=jnp.float32),
    }

    # ---- readout='max' ----
    logits_node, logits_graph = dscrmnt_v2_forward(
        feats, perturbation, params, readout='max', ablation=None)
    jax.block_until_ready((logits_node, logits_graph))

    ref_node, ref_graph = _ref_forward(feats, perturbation, params, readout='max')
    assert logits_node.shape == (G * T, 1) and logits_graph.shape == (G, 1)
    assert np.allclose(np.asarray(logits_node), ref_node, atol=1e-4)
    assert np.allclose(np.asarray(logits_graph), ref_graph, atol=1e-4)

    # ---- readout='max_zero' with -1 padding (each graph keeps >=1 valid index) ----
    pert_z = perturbation.at[:, K - 1].set(-1)
    pert_z = pert_z.at[0, K - 2].set(-1)
    ln_z, lg_z = dscrmnt_v2_forward(feats, pert_z, params, readout='max_zero', ablation=None)
    jax.block_until_ready((ln_z, lg_z))
    ref_ln_z, ref_lg_z = _ref_forward(feats, pert_z, params, readout='max_zero')
    assert np.allclose(np.asarray(ln_z), ref_ln_z, atol=1e-4)
    assert np.allclose(np.asarray(lg_z), ref_lg_z, atol=1e-4)

    # ---- ablation branches ----
    ln_a, lg_a = dscrmnt_v2_forward(feats, perturbation, params, readout='max', ablation='node')
    jax.block_until_ready((ln_a, lg_a))
    assert np.all(np.asarray(ln_a) == 0.0)
    assert np.allclose(np.asarray(lg_a), ref_graph, atol=1e-4)

    print("KERNEL_OK")
</pallas_src>

<mosaic_0001>
module attributes {stable_mosaic.version = 11 : i64} {
  func.func @_dscrmnt_kernel(%arg0: i32, %arg1: memref<8x5xi32, #tpu.memory_space<vmem>>, %arg2: memref<16x32xf32, #tpu.memory_space<vmem>>, %arg3: memref<32x128xf32, #tpu.memory_space<vmem>>, %arg4: memref<1x128xf32, #tpu.memory_space<vmem>>, %arg5: memref<8x128xf32, #tpu.memory_space<vmem>>) attributes {dimension_semantics = [#tpu.dimension_semantics<parallel>], iteration_bounds = array<i64: 1>, scalar_prefetch = 0 : i64, scratch_operands = 0 : i64, tpu.core_type = #tpu.core_type<tc>, window_params = [{transform_indices = @transform_0, window_bounds = array<i64: 8, 5>}, {pipeline_mode = #tpu.pipeline_mode<synchronous>, transform_indices = @transform_1, window_bounds = array<i64: 16, 32>}, {pipeline_mode = #tpu.pipeline_mode<synchronous>, transform_indices = @transform_2, window_bounds = array<i64: 32, 128>}, {pipeline_mode = #tpu.pipeline_mode<synchronous>, transform_indices = @transform_3, window_bounds = array<i64: 1, 128>}, {transform_indices = @transform_4, window_bounds = array<i64: 8, 128>}]} {
    %c0 = arith.constant 0 : index
    %c0_0 = arith.constant 0 : index
    %0 = vector.load %arg2[%c0, %c0_0] : memref<16x32xf32, #tpu.memory_space<vmem>>, vector<16x32xf32>
    %1 = tpu.iota {dimensions = array<i32: 1>} : vector<8x16xi32>
    %cst = arith.constant 0xFF800000 : f32
    %2 = vector.broadcast %cst : f32 to vector<8x32xf32>
    %c0_1 = arith.constant 0 : index
    %c0_2 = arith.constant 0 : index
    %3 = vector.load %arg1[%c0_1, %c0_2] : memref<8x5xi32, #tpu.memory_space<vmem>>, vector<8x1xi32>
    %c0_i32 = arith.constant 0 : i32
    %4 = vector.broadcast %c0_i32 : i32 to vector<8x1xi32>
    %5 = arith.cmpi slt, %3, %4 : vector<8x1xi32>
    %c16_i32 = arith.constant 16 : i32
    %6 = vector.broadcast %c16_i32 : i32 to vector<8x1xi32>
    %7 = arith.addi %3, %6 : vector<8x1xi32>
    %8 = arith.select %5, %7, %3 : vector<8x1xi1>, vector<8x1xi32>
    %9 = vector.broadcast %8 : vector<8x1xi32> to vector<8x16xi32>
    %10 = arith.cmpi eq, %1, %9 : vector<8x16xi32>
    %11 = arith.extui %10 : vector<8x16xi1> to vector<8x16xi32>
    %12 = arith.sitofp %11 : vector<8x16xi32> to vector<8x16xf32>
    %cst_3 = arith.constant dense<0.000000e+00> : vector<8x32xf32>
    %13 = tpu.matmul %12, %0, %cst_3 {dimension_numbers = #tpu.dot_dimension_numbers<[1], [0], [0], [1], [0, 0, 1, 1], [], []>} : vector<8x16xf32>, vector<16x32xf32>, vector<8x32xf32> -> vector<8x32xf32>
    %14 = arith.maximumf %2, %13 : vector<8x32xf32>
    %c0_4 = arith.constant 0 : index
    %c1 = arith.constant 1 : index
    %15 = vector.load %arg1[%c0_4, %c1] : memref<8x5xi32, #tpu.memory_space<vmem>>, vector<8x1xi32>
    %c0_i32_5 = arith.constant 0 : i32
    %16 = vector.broadcast %c0_i32_5 : i32 to vector<8x1xi32>
    %17 = arith.cmpi slt, %15, %16 : vector<8x1xi32>
    %c16_i32_6 = arith.constant 16 : i32
    %18 = vector.broadcast %c16_i32_6 : i32 to vector<8x1xi32>
    %19 = arith.addi %15, %18 : vector<8x1xi32>
    %20 = arith.select %17, %19, %15 : vector<8x1xi1>, vector<8x1xi32>
    %21 = vector.broadcast %20 : vector<8x1xi32> to vector<8x16xi32>
    %22 = arith.cmpi eq, %1, %21 : vector<8x16xi32>
    %23 = arith.extui %22 : vector<8x16xi1> to vector<8x16xi32>
    %24 = arith.sitofp %23 : vector<8x16xi32> to vector<8x16xf32>
    %cst_7 = arith.constant dense<0.000000e+00> : vector<8x32xf32>
    %25 = tpu.matmul %24, %0, %cst_7 {dimension_numbers = #tpu.dot_dimension_numbers<[1], [0], [0], [1], [0, 0, 1, 1], [], []>} : vector<8x16xf32>, vector<16x32xf32>, vector<8x32xf32> -> vector<8x32xf32>
    %26 = arith.maximumf %14, %25 : vector<8x32xf32>
    %c0_8 = arith.constant 0 : index
    %c2 = arith.constant 2 : index
    %27 = vector.load %arg1[%c0_8, %c2] : memref<8x5xi32, #tpu.memory_space<vmem>>, vector<8x1xi32>
    %c0_i32_9 = arith.constant 0 : i32
    %28 = vector.broadcast %c0_i32_9 : i32 to vector<8x1xi32>
    %29 = arith.cmpi slt, %27, %28 : vector<8x1xi32>
    %c16_i32_10 = arith.constant 16 : i32
    %30 = vector.broadcast %c16_i32_10 : i32 to vector<8x1xi32>
    %31 = arith.addi %27, %30 : vector<8x1xi32>
    %32 = arith.select %29, %31, %27 : vector<8x1xi1>, vector<8x1xi32>
    %33 = vector.broadcast %32 : vector<8x1xi32> to vector<8x16xi32>
    %34 = arith.cmpi eq, %1, %33 : vector<8x16xi32>
    %35 = arith.extui %34 : vector<8x16xi1> to vector<8x16xi32>
    %36 = arith.sitofp %35 : vector<8x16xi32> to vector<8x16xf32>
    %cst_11 = arith.constant dense<0.000000e+00> : vector<8x32xf32>
    %37 = tpu.matmul %36, %0, %cst_11 {dimension_numbers = #tpu.dot_dimension_numbers<[1], [0], [0], [1], [0, 0, 1, 1], [], []>} : vector<8x16xf32>, vector<16x32xf32>, vector<8x32xf32> -> vector<8x32xf32>
    %38 = arith.maximumf %26, %37 : vector<8x32xf32>
    %c0_12 = arith.constant 0 : index
    %c3 = arith.constant 3 : index
    %39 = vector.load %arg1[%c0_12, %c3] : memref<8x5xi32, #tpu.memory_space<vmem>>, vector<8x1xi32>
    %c0_i32_13 = arith.constant 0 : i32
    %40 = vector.broadcast %c0_i32_13 : i32 to vector<8x1xi32>
    %41 = arith.cmpi slt, %39, %40 : vector<8x1xi32>
    %c16_i32_14 = arith.constant 16 : i32
    %42 = vector.broadcast %c16_i32_14 : i32 to vector<8x1xi32>
    %43 = arith.addi %39, %42 : vector<8x1xi32>
    %44 = arith.select %41, %43, %39 : vector<8x1xi1>, vector<8x1xi32>
    %45 = vector.broadcast %44 : vector<8x1xi32> to vector<8x16xi32>
    %46 = arith.cmpi eq, %1, %45 : vector<8x16xi32>
    %47 = arith.extui %46 : vector<8x16xi1> to vector<8x16xi32>
    %48 = arith.sitofp %47 : vector<8x16xi32> to vector<8x16xf32>
    %cst_15 = arith.constant dense<0.000000e+00> : vector<8x32xf32>
    %49 = tpu.matmul %48, %0, %cst_15 {dimension_numbers = #tpu.dot_dimension_numbers<[1], [0], [0], [1], [0, 0, 1, 1], [], []>} : vector<8x16xf32>, vector<16x32xf32>, vector<8x32xf32> -> vector<8x32xf32>
    %50 = arith.maximumf %38, %49 : vector<8x32xf32>
    %c0_16 = arith.constant 0 : index
    %c4 = arith.constant 4 : index
    %51 = vector.load %arg1[%c0_16, %c4] : memref<8x5xi32, #tpu.memory_space<vmem>>, vector<8x1xi32>
    %c0_i32_17 = arith.constant 0 : i32
    %52 = vector.broadcast %c0_i32_17 : i32 to vector<8x1xi32>
    %53 = arith.cmpi slt, %51, %52 : vector<8x1xi32>
    %c16_i32_18 = arith.constant 16 : i32
    %54 = vector.broadcast %c16_i32_18 : i32 to vector<8x1xi32>
    %55 = arith.addi %51, %54 : vector<8x1xi32>
    %56 = arith.select %53, %55, %51 : vector<8x1xi1>, vector<8x1xi32>
    %57 = vector.broadcast %56 : vector<8x1xi32> to vector<8x16xi32>
    %58 = arith.cmpi eq, %1, %57 : vector<8x16xi32>
    %59 = arith.extui %58 : vector<8x16xi1> to vector<8x16xi32>
    %60 = arith.sitofp %59 : vector<8x16xi32> to vector<8x16xf32>
    %cst_19 = arith.constant dense<0.000000e+00> : vector<8x32xf32>
    %61 = tpu.matmul %60, %0, %cst_19 {dimension_numbers = #tpu.dot_dimension_numbers<[1], [0], [0], [1], [0, 0, 1, 1], [], []>} : vector<8x16xf32>, vector<16x32xf32>, vector<8x32xf32> -> vector<8x32xf32>
    %62 = arith.maximumf %50, %61 : vector<8x32xf32>
    %c0_20 = arith.constant 0 : index
    %c0_21 = arith.constant 0 : index
    %63 = vector.load %arg3[%c0_20, %c0_21] : memref<32x128xf32, #tpu.memory_space<vmem>>, vector<32x128xf32>
    %cst_22 = arith.constant dense<0.000000e+00> : vector<8x128xf32>
    %64 = tpu.matmul %62, %63, %cst_22 {dimension_numbers = #tpu.dot_dimension_numbers<[1], [0], [0], [1], [0, 0, 1, 1], [], []>} : vector<8x32xf32>, vector<32x128xf32>, vector<8x128xf32> -> vector<8x128xf32>
    %c0_23 = arith.constant 0 : index
    %c0_24 = arith.constant 0 : index
    %65 = vector.load %arg4[%c0_23, %c0_24] : memref<1x128xf32, #tpu.memory_space<vmem>>, vector<1x128xf32>
    %66 = vector.broadcast %65 : vector<1x128xf32> to vector<8x128xf32>
    %67 = arith.addf %64, %66 : vector<8x128xf32>
    %c0_25 = arith.constant 0 : index
    %c0_26 = arith.constant 0 : index
    %68 = vector.load %arg5[%c0_25, %c0_26] : memref<8x128xf32, #tpu.memory_space<vmem>>, vector<8x128xf32>
    tpu.vector_store %arg5[%c0_25, %c0_26], %67 {strides = array<i32>} : memref<8x128xf32, #tpu.memory_space<vmem>>, vector<8x128xf32>,
    return
  }
  func.func @transform_0(%arg0: i32) -> (i32, i32) {
    %c0_i32 = arith.constant 0 : i32
    %c0_i32_0 = arith.constant 0 : i32
    return %arg0, %c0_i32 : i32, i32
  }
  func.func @transform_1(%arg0: i32) -> (i32, i32) {
    %c0_i32 = arith.constant 0 : i32
    %c0_i32_0 = arith.constant 0 : i32
    %c0_i32_1 = arith.constant 0 : i32
    return %c0_i32, %c0_i32_0 : i32, i32
  }
  func.func @transform_2(%arg0: i32) -> (i32, i32) {
    %c0_i32 = arith.constant 0 : i32
    %c0_i32_0 = arith.constant 0 : i32
    %c0_i32_1 = arith.constant 0 : i32
    return %c0_i32, %c0_i32_0 : i32, i32
  }
  func.func @transform_3(%arg0: i32) -> (i32, i32) {
    %c0_i32 = arith.constant 0 : i32
    %c0_i32_0 = arith.constant 0 : i32
    %c0_i32_1 = arith.constant 0 : i32
    return %c0_i32, %c0_i32_0 : i32, i32
  }
  func.func @transform_4(%arg0: i32) -> (i32, i32) {
    %c0_i32 = arith.constant 0 : i32
    %c0_i32_0 = arith.constant 0 : i32
    return %arg0, %c0_i32 : i32, i32
  }
}

</mosaic_0001>

<llo_original>
// kernel: _forward_impl.1
$region0: #{_forward_impl.1}
  #allocation0 [shape = 'u32[]', space=smem, size = 0x4, offset = 0x4, fixed_abs, tag = 'smem constant byte address 0x4 - core index']
  #allocation1 [shape = 'u32[72,128]{1,0:T(1,128)}', space=vmem, size = 0x9000, scoped, tag = 'internal scratch']
  %s0 = inlined_call_operand.vmem [shape: s32[8,5], index: 0, kind: input, shape index: {}]
  %s1 = inlined_call_operand.vmem [shape: f32[16,32], index: 1, kind: input, shape index: {}]
  %s2 = inlined_call_operand.vmem [shape: f32[32,128], index: 2, kind: input, shape index: {}]
  %s3 = inlined_call_operand.vmem [shape: f32[1,128], index: 3, kind: input, shape index: {}]
  %s4 = inlined_call_operand.vmem [shape: f32[8,128], index: 4, kind: output, shape index: {}]
  %s5 = sld [smem:[#allocation0]]
  $region26: #{_forward_impl.1} parent=0
    _
  %s7 = ssub.s32 1, %s5
  %s8 = scalar_select 0, %s7, %s5
  // Predicated region
  $region2: #{_forward_impl.1} parent=0 // pred_check
    _
  $region3: #{_forward_impl.1} parent=0 // pred_check_branch
    %10 = sbr.rel (0) target = $region5
  $region4: #{_forward_impl.1} parent=0 // pred_region
    _
  $region5: #{_forward_impl.1} parent=0 // pred_fallthru
    _
  // Predicated region
  $region6: #{_forward_impl.1} parent=0 // pred_check
    _
  $region7: #{_forward_impl.1} parent=0 // pred_check_branch
    %12 = sbr.rel (0) target = $region9
  $region8: #{_forward_impl.1} parent=0 // pred_region
    _
  $region9: #{_forward_impl.1} parent=0 // pred_fallthru
    _
  // Predicated region
  $region10: #{_forward_impl.1} parent=0 // pred_check
    _
  $region11: #{_forward_impl.1} parent=0 // pred_check_branch
    %14 = sbr.rel (0) target = $region13
  $region12: #{_forward_impl.1} parent=0 // pred_region
    _
  $region13: #{_forward_impl.1} parent=0 // pred_fallthru
    _
  // Predicated region
  $region14: #{_forward_impl.1} parent=0 // pred_check
    _
  $region15: #{_forward_impl.1} parent=0 // pred_check_branch
    %16 = sbr.rel (0) target = $region17
  $region16: #{_forward_impl.1} parent=0 // pred_region
    _
  $region17: #{_forward_impl.1} parent=0 // pred_fallthru
    _
  %v17 = vld [vmem:[%s1] sm:$0xff]
  %v18 = vld [vmem:[%s1 + $0x8] sm:$0xff]
  %v19 = vlaneseq
  %v20 = vand.u32 %v19, 127
  %v21 = vld [vmem:[%s0] sm:$0xff]
  %vm22 = vcmp.lt.s32.totalorder %v21, 0
  %v23 = vadd.s32 %v21, 16
  %v24 = vsel %vm22, %v23, %v21
  %25 = vset.pattern.permute.xlu0 0
  %26 = vperm.xlu0 %25, %v24
  %v27 = vpop.permute.xlu0 %26
  %vm28 = vcmp.eq.s32.totalorder %v20, %v27
  %v29 = vsel %vm28, 1, 0
  %v30 = vcvt.s32.f32 %v29
  %vm31 = vcmask 130048
  %v33 = vsel %vm31, %v30, 0
  %35 = vmatpush.msra.mxu0 0.0
  %36 = vmatpush.msra.mxu0 0.0
  %37 = vmatpush.msra.mxu0 0.0
  %38 = vmatpush.msra.mxu0 0.0
  %39 = vmatpush.msra.mxu0 0.0
  %40 = vmatpush.msra.mxu0 0.0
  %41 = vmatpush.msra.mxu0 0.0
  %42 = vmatpush.msra.mxu0 0.0
  %43 = vmatpush.msra.mxu0 0.0
  %44 = vmatpush.msra.mxu0 0.0
  %45 = vmatpush.msra.mxu0 0.0
  %46 = vmatpush.msra.mxu0 0.0
  %47 = vmatpush.msra.mxu0 0.0
  %48 = vmatpush.msra.mxu0 0.0
  %49 = vmatpush.msra.mxu0 %v18
  %50 = vmatpush.msra.mxu0 %v17
  %51 = vmatmul.f32.gmra.mxu0 %v33
  %v52 = vpop.f32.mrf.mxu0
  %v53 = vadd.f32 0.0, %v52
  %54 = vdwg.mxu0
  %55 = vset.pattern.permute.xlu0 1
  %56 = vperm.xlu0 %55, %v24
  %v57 = vpop.permute.xlu0 %56
  %vm58 = vcmp.eq.s32.totalorder %v20, %v57
  %v59 = vsel %vm58, 1, 0
  %v60 = vcvt.s32.f32 %v59
  %v62 = vsel %vm31, %v60, 0
  %64 = vmatpush.msra.mxu0 0.0
  %65 = vmatpush.msra.mxu0 0.0
  %66 = vmatpush.msra.mxu0 0.0
  %67 = vmatpush.msra.mxu0 0.0
  %68 = vmatpush.msra.mxu0 0.0
  %69 = vmatpush.msra.mxu0 0.0
  %70 = vmatpush.msra.mxu0 0.0
  %71 = vmatpush.msra.mxu0 0.0
  %72 = vmatpush.msra.mxu0 0.0
  %73 = vmatpush.msra.mxu0 0.0
  %74 = vmatpush.msra.mxu0 0.0
  %75 = vmatpush.msra.mxu0 0.0
  %76 = vmatpush.msra.mxu0 0.0
  %77 = vmatpush.msra.mxu0 0.0
  %78 = vmatpush.msra.mxu0 %v18
  %79 = vmatpush.msra.mxu0 %v17
  %80 = vmatmul.f32.gmra.mxu0 %v62
  %v81 = vpop.f32.mrf.mxu0
  %v82 = vadd.f32 0.0, %v81
  %83 = vdwg.mxu0
  %v84 = vmax.f32 %v53, %v82
  %85 = vset.pattern.permute.xlu0 2
  %86 = vperm.xlu0 %85, %v24
  %v87 = vpop.permute.xlu0 %86
  %vm88 = vcmp.eq.s32.totalorder %v20, %v87
  %v89 = vsel %vm88, 1, 0
  %v90 = vcvt.s32.f32 %v89
  %v92 = vsel %vm31, %v90, 0
  %94 = vmatpush.msra.mxu0 0.0
  %95 = vmatpush.msra.mxu0 0.0
  %96 = vmatpush.msra.mxu0 0.0
  %97 = vmatpush.msra.mxu0 0.0
  %98 = vmatpush.msra.mxu0 0.0
  %99 = vmatpush.msra.mxu0 0.0
  %100 = vmatpush.msra.mxu0 0.0
  %101 = vmatpush.msra.mxu0 0.0
  %102 = vmatpush.msra.mxu0 0.0
  %103 = vmatpush.msra.mxu0 0.0
  %104 = vmatpush.msra.mxu0 0.0
  %105 = vmatpush.msra.mxu0 0.0
  %106 = vmatpush.msra.mxu0 0.0
  %107 = vmatpush.msra.mxu0 0.0
  %108 = vmatpush.msra.mxu0 %v18
  %109 = vmatpush.msra.mxu0 %v17
  %110 = vmatmul.f32.gmra.mxu0 %v92
  %v111 = vpop.f32.mrf.mxu0
  %v112 = vadd.f32 0.0, %v111
  %113 = vdwg.mxu0
  %v114 = vmax.f32 %v84, %v112
  %115 = vset.pattern.permute.xlu0 3
  %116 = vperm.xlu0 %115, %v24
  %v117 = vpop.permute.xlu0 %116
  %vm118 = vcmp.eq.s32.totalorder %v20, %v117
  %v119 = vsel %vm118, 1, 0
  %v120 = vcvt.s32.f32 %v119
  %v122 = vsel %vm31, %v120, 0
  %124 = vmatpush.msra.mxu0 0.0
  %125 = vmatpush.msra.mxu0 0.0
  %126 = vmatpush.msra.mxu0 0.0
  %127 = vmatpush.msra.mxu0 0.0
  %128 = vmatpush.msra.mxu0 0.0
  %129 = vmatpush.msra.mxu0 0.0
  %130 = vmatpush.msra.mxu0 0.0
  %131 = vmatpush.msra.mxu0 0.0
  %132 = vmatpush.msra.mxu0 0.0
  %133 = vmatpush.msra.mxu0 0.0
  %134 = vmatpush.msra.mxu0 0.0
  %135 = vmatpush.msra.mxu0 0.0
  %136 = vmatpush.msra.mxu0 0.0
  %137 = vmatpush.msra.mxu0 0.0
  %138 = vmatpush.msra.mxu0 %v18
  %139 = vmatpush.msra.mxu0 %v17
  %140 = vmatmul.f32.gmra.mxu0 %v122
  %v141 = vpop.f32.mrf.mxu0
  %v142 = vadd.f32 0.0, %v141
  %143 = vdwg.mxu0
  %v144 = vmax.f32 %v114, %v142
  %145 = vset.pattern.permute.xlu0 4
  %146 = vperm.xlu0 %145, %v24
  %v147 = vpop.permute.xlu0 %146
  %vm148 = vcmp.eq.s32.totalorder %v20, %v147
  %v149 = vsel %vm148, 1, 0
  %v150 = vcvt.s32.f32 %v149
  %v152 = vsel %vm31, %v150, 0
  %154 = vmatpush.msra.mxu0 0.0
  %155 = vmatpush.msra.mxu0 0.0
  %156 = vmatpush.msra.mxu0 0.0
  %157 = vmatpush.msra.mxu0 0.0
  %158 = vmatpush.msra.mxu0 0.0
  %159 = vmatpush.msra.mxu0 0.0
  %160 = vmatpush.msra.mxu0 0.0
  %161 = vmatpush.msra.mxu0 0.0
  %162 = vmatpush.msra.mxu0 0.0
  %163 = vmatpush.msra.mxu0 0.0
  %164 = vmatpush.msra.mxu0 0.0
  %165 = vmatpush.msra.mxu0 0.0
  %166 = vmatpush.msra.mxu0 0.0
  %167 = vmatpush.msra.mxu0 0.0
  %168 = vmatpush.msra.mxu0 %v18
  %169 = vmatpush.msra.mxu0 %v17
  %170 = vmatmul.f32.gmra.mxu0 %v152
  %v171 = vpop.f32.mrf.mxu0
  %v172 = vadd.f32 0.0, %v171
  %173 = vdwg.mxu0
  %v174 = vmax.f32 %v144, %v172
  %v175 = vld [vmem:[%s2] sm:$0xff]
  %v176 = vld [vmem:[%s2 + $0x8] sm:$0xff]
  %v177 = vld [vmem:[%s2 + $0x10] sm:$0xff]
  %v178 = vld [vmem:[%s2 + $0x18] sm:$0xff]
  %v179 = vld [vmem:[%s3] sm:$0x1]
  %v181 = vperm.slane %v179, 0
  %vm183 = vcmask 261120
  %v185 = vsel %vm183, %v174, 0
  %187 = vmatpush.msra.mxu0 0.0
  %188 = vmatpush.msra.mxu0 0.0
  %189 = vmatpush.msra.mxu0 0.0
  %190 = vmatpush.msra.mxu0 0.0
  %191 = vmatpush.msra.mxu0 0.0
  %192 = vmatpush.msra.mxu0 0.0
  %193 = vmatpush.msra.mxu0 0.0
  %194 = vmatpush.msra.mxu0 0.0
  %195 = vmatpush.msra.mxu0 0.0
  %196 = vmatpush.msra.mxu0 0.0
  %197 = vmatpush.msra.mxu0 0.0
  %198 = vmatpush.msra.mxu0 0.0
  %199 = vmatpush.msra.mxu0 %v178
  %200 = vmatpush.msra.mxu0 %v177
  %201 = vmatpush.msra.mxu0 %v176
  %202 = vmatpush.msra.mxu0 %v175
  %203 = vmatmul.f32.gmra.mxu0 %v185
  %v204 = vpop.f32.mrf.mxu0
  %v205 = vadd.f32 %v181, %v204
  %206 = vdwg.mxu0
  %207 = vst [vmem:[%s4] sm:$0xff] %v205
  // Predicated region
  $region18: #{_forward_impl.1} parent=0 // pred_check
    _
  $region19: #{_forward_impl.1} parent=0 // pred_check_branch
    %209 = sbr.rel (0) target = $region21
  $region20: #{_forward_impl.1} parent=0 // pred_region
    _
  $region21: #{_forward_impl.1} parent=0 // pred_fallthru
    _
  // Predicated region
  $region22: #{_forward_impl.1} parent=0 // pred_check
    _
  $region23: #{_forward_impl.1} parent=0 // pred_check_branch
    %211 = sbr.rel (0) target = $region25
  $region24: #{_forward_impl.1} parent=0 // pred_region
    _
  $region25: #{_forward_impl.1} parent=0 // pred_fallthru
    _

</llo_original>
